<compile_context>
chip_gen: v5e
topology: v5e:2x2
jax: 0.10.0
libtpu: 0.0.40
codegen_flags: <defaults>
</compile_context>

<pallas_src>
import functools

import jax
import jax.numpy as jnp
from jax import lax
from jax.experimental import pallas as pl
from jax.experimental.pallas import tpu as pltpu


# --------------------------------------------------------------------------
# tiling helpers
# --------------------------------------------------------------------------
def _row_tile(H):
    """Largest row tile (multiple of 8, <=128) dividing H; else the full H."""
    for th in (128, 64, 32, 16, 8):
        if H % th == 0:
            return th
    return H                      # tiny / odd H: one tile per image


def _elementwise_row_tile(rows):
    for tr in (512, 256, 128, 64, 32, 16, 8):
        if tr <= rows and rows % tr == 0:
            return tr
    return rows


# --------------------------------------------------------------------------
# Kernel 1: [optional fused per-channel affine + ReLU] -> 3x3 conv as banded
#           matmuls + per-tile partial batch statistics.
# --------------------------------------------------------------------------
def _conv3x3_rows_kernel(*refs, TH, HB, fuse_input_act, has_halo):
    idx = 0
    xc_ref = refs[idx]; idx += 1
    if has_halo:
        xt_ref = refs[idx]; xb_ref = refs[idx + 1]; idx += 2
    band_ref = refs[idx]; bias_ref = refs[idx + 1]; idx += 2
    if fuse_input_act:
        scale_ref = refs[idx]; shift_ref = refs[idx + 1]; idx += 2
    out_ref, psum_ref, pssq_ref = refs[idx:idx + 3]

    body = xc_ref[0]                                 # (TH, W*Cin)  current row tile
    if fuse_input_act:                               # previous layer's BN + ReLU
        scale = scale_ref[...]                       # (1, W*Cin)
        shift = shift_ref[...]
        body = jnp.maximum(body * scale + shift, 0.0)

    if has_halo:
        i = pl.program_id(1)
        n_tiles = pl.num_programs(1)
        top = xt_ref[0, HB - 1:HB, :]                # (1, W*Cin) row just above tile
        bot = xb_ref[0, 0:1, :]                      # (1, W*Cin) row just below tile
        if fuse_input_act:
            top = jnp.maximum(top * scale + shift, 0.0)
            bot = jnp.maximum(bot * scale + shift, 0.0)
        # H zero-padding: first / last row tile gets zero halo rows.
        top = jnp.where(i == 0, 0.0, top)
        bot = jnp.where(i == n_tiles - 1, 0.0, bot)
    else:                                            # whole image in one tile
        top = jnp.zeros((1, body.shape[-1]), body.dtype)
        bot = top

    win = jnp.concatenate([top, body, bot], axis=0)  # (TH+2, W*Cin)

    # 3 banded matmuls (one per kernel row); W zero-padding is implicit in band.
    acc = jnp.dot(win[0:TH, :], band_ref[0], preferred_element_type=jnp.float32)
    acc = acc + jnp.dot(win[1:TH + 1, :], band_ref[1],
                        preferred_element_type=jnp.float32)
    acc = acc + jnp.dot(win[2:TH + 2, :], band_ref[2],
                        preferred_element_type=jnp.float32)
    acc = acc + bias_ref[...]                        # (TH, W*Cout)

    out_ref[0] = acc
    # per-(batch, row-tile) partial statistics; reduced in JAX glue so both
    # grid axes stay "parallel" (no cross-step accumulation / serialization).
    psum_ref[0, 0] = jnp.sum(acc, axis=0, keepdims=True)
    pssq_ref[0, 0] = jnp.sum(acc * acc, axis=0, keepdims=True)


def conv3x3_rows(x_flat, band, bias_flat, scale_flat=None, shift_flat=None, *,
                 H, W, Cin, Cout, fuse_input_act):
    """x_flat: (N, H, W*Cin) -> (conv_out (N, H, W*Cout), psum, pssq)."""
    N = x_flat.shape[0]
    TH = _row_tile(H)
    n_tiles = H // TH
    has_halo = n_tiles > 1
    HB = 8 if (H % 8 == 0 and TH % 8 == 0) else TH   # halo block height
    r = TH // HB
    n_hblocks = H // HB

    kernel = functools.partial(_conv3x3_rows_kernel, TH=TH, HB=HB,
                               fuse_input_act=fuse_input_act, has_halo=has_halo)

    # current row tile (always)
    in_specs = [pl.BlockSpec((1, TH, W * Cin), lambda n, i: (n, i, 0))]
    operands = [x_flat]
    if has_halo:
        in_specs += [
            # HB-row block containing the row just above the tile (clamped at 0)
            pl.BlockSpec((1, HB, W * Cin),
                         lambda n, i: (n, jnp.maximum(i * r - 1, 0), 0)),
            # HB-row block containing the row just below the tile (clamped at end)
            pl.BlockSpec((1, HB, W * Cin),
                         lambda n, i: (n, jnp.minimum((i + 1) * r, n_hblocks - 1), 0)),
        ]
        operands += [x_flat, x_flat]
    # banded weights + bias (resident, tiny)
    in_specs += [
        pl.BlockSpec((3, W * Cin, W * Cout), lambda n, i: (0, 0, 0)),
        pl.BlockSpec((1, W * Cout), lambda n, i: (0, 0)),
    ]
    operands += [band, bias_flat]
    if fuse_input_act:
        in_specs += [
            pl.BlockSpec((1, W * Cin), lambda n, i: (0, 0)),
            pl.BlockSpec((1, W * Cin), lambda n, i: (0, 0)),
        ]
        operands += [scale_flat, shift_flat]

    grid_spec = pltpu.PrefetchScalarGridSpec(
        num_scalar_prefetch=0,
        grid=(N, n_tiles),
        in_specs=in_specs,
        out_specs=[
            pl.BlockSpec((1, TH, W * Cout), lambda n, i: (n, i, 0)),
            pl.BlockSpec((1, 1, 1, W * Cout), lambda n, i: (n, i, 0, 0)),
            pl.BlockSpec((1, 1, 1, W * Cout), lambda n, i: (n, i, 0, 0)),
        ],
    )

    out, psum, pssq = pl.pallas_call(
        kernel,
        out_shape=(
            jax.ShapeDtypeStruct((N, H, W * Cout), jnp.float32),
            jax.ShapeDtypeStruct((N, n_tiles, 1, W * Cout), jnp.float32),
            jax.ShapeDtypeStruct((N, n_tiles, 1, W * Cout), jnp.float32),
        ),
        grid_spec=grid_spec,
        compiler_params=pltpu.CompilerParams(
            dimension_semantics=("parallel", "parallel")),
    )(*operands)
    return out, psum, pssq


# --------------------------------------------------------------------------
# Kernel 2: final BatchNorm affine + ReLU (lane-dense, row-tiled elementwise)
# --------------------------------------------------------------------------
def _bn_relu_kernel(x_ref, scale_ref, shift_ref, o_ref):
    o_ref[...] = jnp.maximum(x_ref[...] * scale_ref[...] + shift_ref[...], 0.0)


def bn_relu_rows(x2d, scale_flat, shift_flat):
    rows, lanes = x2d.shape
    tr = _elementwise_row_tile(rows)
    return pl.pallas_call(
        _bn_relu_kernel,
        out_shape=jax.ShapeDtypeStruct((rows, lanes), jnp.float32),
        grid_spec=pltpu.PrefetchScalarGridSpec(
            num_scalar_prefetch=0,
            grid=(rows // tr,),
            in_specs=[
                pl.BlockSpec((tr, lanes), lambda i: (i, 0)),
                pl.BlockSpec((1, lanes), lambda i: (0, 0)),
                pl.BlockSpec((1, lanes), lambda i: (0, 0)),
            ],
            out_specs=pl.BlockSpec((tr, lanes), lambda i: (i, 0)),
        ),
        compiler_params=pltpu.CompilerParams(
            dimension_semantics=("parallel",)),
    )(x2d, scale_flat, shift_flat)


# --------------------------------------------------------------------------
# JAX glue: banded-weight construction, BN folding, layout plumbing
# --------------------------------------------------------------------------
def _banded_weights(w_hwio, W):
    """B[ky][w*Cin+ci, wo*Cout+co] = w[ky, w-wo+1, ci, co] (zero outside band)."""
    kh, kw, Cin, Cout = w_hwio.shape
    w_pos = jnp.arange(W)[:, None, None]
    o_pos = jnp.arange(W)[None, :, None]
    dx = jnp.arange(kw)[None, None, :]
    taps = (w_pos == o_pos + dx - 1).astype(w_hwio.dtype)     # (W, W, kw)
    band = jnp.einsum('pqd,ydio->ypiqo', taps, w_hwio)        # (kh, W, Cin, W, Cout)
    return band.reshape(kh, W * Cin, W * Cout)


def _bn_scale_shift(psum, pssq, count, gamma, beta, W, C, eps=1e-5):
    s = psum.sum(axis=(0, 1, 2)).reshape(W, C).sum(axis=0)
    ss = pssq.sum(axis=(0, 1, 2)).reshape(W, C).sum(axis=0)
    mean = s / count
    # NOTE(numerics): E[x^2]-E[x]^2 in f32; clamp against tiny negative variance.
    var = jnp.maximum(ss / count - mean * mean, 0.0)
    scale = gamma * lax.rsqrt(var + eps)
    shift = beta - mean * scale
    return scale, shift


def conv_block(x_flat, params, *, H, W, Cin, Cmid, Cout):
    N = x_flat.shape[0]
    count = float(N * H * W)

    # conv1 (no fused input activation)
    band1 = _banded_weights(params["w1"], W)
    c1, s1, q1 = conv3x3_rows(x_flat, band1, jnp.tile(params["b1"], W)[None, :],
                              H=H, W=W, Cin=Cin, Cout=Cmid,
                              fuse_input_act=False)
    sc1, sh1 = _bn_scale_shift(s1, q1, count, params["gamma1"], params["beta1"],
                               W, Cmid)

    # conv2 with BN1 + ReLU fused into its input path (skips one HBM round trip)
    band2 = _banded_weights(params["w2"], W)
    c2, s2, q2 = conv3x3_rows(c1, band2, jnp.tile(params["b2"], W)[None, :],
                              jnp.tile(sc1, W)[None, :], jnp.tile(sh1, W)[None, :],
                              H=H, W=W, Cin=Cmid, Cout=Cout,
                              fuse_input_act=True)
    sc2, sh2 = _bn_scale_shift(s2, q2, count, params["gamma2"], params["beta2"],
                               W, Cout)

    # final BN2 + ReLU pass (needs global stats of conv2's output)
    out2d = bn_relu_rows(c2.reshape(N * H, W * Cout),
                         jnp.tile(sc2, W)[None, :], jnp.tile(sh2, W)[None, :])
    return out2d.reshape(N, H, W * Cout)


def conv_block_nested(x_nchw, y_list_nchw, params):
    """x: NCHW; y_list: list of NCHW skip tensors (may be empty). Returns NCHW."""
    x = jnp.transpose(x_nchw, (0, 2, 3, 1))                 # NCHW -> NHWC
    x = jnp.repeat(jnp.repeat(x, 2, axis=1), 2, axis=2)     # nearest 2x upsample
    if y_list_nchw:                                         # `if y:` in PyTorch forward
        ys = [jnp.transpose(yy, (0, 2, 3, 1)) for yy in y_list_nchw]
        x = jnp.concatenate([x] + ys, axis=-1)
    N, H, W, Cin = x.shape
    Cmid = params["w1"].shape[-1]
    Cout = params["w2"].shape[-1]
    out_flat = conv_block(x.reshape(N, H, W * Cin), params,
                          H=H, W=W, Cin=Cin, Cmid=Cmid, Cout=Cout)
    out = out_flat.reshape(N, H, W, Cout)
    return jnp.transpose(out, (0, 3, 1, 2))                  # NHWC -> NCHW


def init_params(key, in_channels, mid_channels, out_channels):
    k1, k2, k3, k4, k5, k6, k7, k8 = jax.random.split(key, 8)
    return {
        # weights kept in (kh, kw, Cin, Cout) layout (HWIO)
        "w1": 0.1 * jax.random.normal(k1, (3, 3, in_channels, mid_channels), jnp.float32),
        "b1": 0.1 * jax.random.normal(k2, (mid_channels,), jnp.float32),
        "gamma1": 1.0 + 0.1 * jax.random.normal(k3, (mid_channels,), jnp.float32),
        "beta1": 0.1 * jax.random.normal(k4, (mid_channels,), jnp.float32),
        "w2": 0.1 * jax.random.normal(k5, (3, 3, mid_channels, out_channels), jnp.float32),
        "b2": 0.1 * jax.random.normal(k6, (out_channels,), jnp.float32),
        "gamma2": 1.0 + 0.1 * jax.random.normal(k7, (out_channels,), jnp.float32),
        "beta2": 0.1 * jax.random.normal(k8, (out_channels,), jnp.float32),
    }


# --------------------------------------------------------------------------
# pure-JAX reference (training-mode Conv+BN+ReLU), used for a numerical check
# --------------------------------------------------------------------------
def _reference(x_nchw, y_list, p):
    x = jnp.transpose(x_nchw, (0, 2, 3, 1))
    x = jnp.repeat(jnp.repeat(x, 2, axis=1), 2, axis=2)
    if y_list:
        x = jnp.concatenate(
            [x] + [jnp.transpose(t, (0, 2, 3, 1)) for t in y_list], axis=-1)

    def conv(v, w, b):
        return lax.conv_general_dilated(
            v, w, window_strides=(1, 1), padding="SAME",
            dimension_numbers=("NHWC", "HWIO", "NHWC"),
            precision=lax.Precision.HIGHEST) + b

    def bn_relu(v, g, bt):
        mean = v.mean(axis=(0, 1, 2))
        var = v.var(axis=(0, 1, 2))          # biased variance (training-mode BN)
        return jnp.maximum((v - mean) * lax.rsqrt(var + 1e-5) * g + bt, 0.0)

    h = bn_relu(conv(x, p["w1"], p["b1"]), p["gamma1"], p["beta1"])
    h = bn_relu(conv(h, p["w2"], p["b2"]), p["gamma2"], p["beta2"])
    return jnp.transpose(h, (0, 3, 1, 2))


if __name__ == "__main__":
    key = jax.random.PRNGKey(0)
    kx, ky, kp = jax.random.split(key, 3)

    # x: (N=2, 4, 8, 8) -> upsampled to 16x16; y: one skip tensor (2, 4, 16, 16)
    x = jax.random.normal(kx, (2, 4, 8, 8), jnp.float32)
    y = [jax.random.normal(ky, (2, 4, 16, 16), jnp.float32)]

    in_ch, mid_ch, out_ch = 4 + 4, 8, 8
    params = init_params(kp, in_ch, mid_ch, out_ch)

    out = jax.block_until_ready(conv_block_nested(x, y, params))
    assert out.shape == (2, out_ch, 16, 16), out.shape

    ref = jax.block_until_ready(_reference(x, y, params))
    err = float(jnp.max(jnp.abs(out - ref)))
    assert err < 1e-2, f"max abs error vs reference: {err}"

    print("KERNEL_OK")
</pallas_src>

<mosaic_0001>
module attributes {stable_mosaic.version = 11 : i64} {
  func.func @_conv3x3_rows_kernel(%arg0: i32, %arg1: i32, %arg2: memref<1x16x128xf32, #tpu.memory_space<vmem>>, %arg3: memref<3x128x128xf32, #tpu.memory_space<vmem>>, %arg4: memref<1x128xf32, #tpu.memory_space<vmem>>, %arg5: memref<1x16x128xf32, #tpu.memory_space<vmem>>, %arg6: memref<1x1x1x128xf32, #tpu.memory_space<vmem>>, %arg7: memref<1x1x1x128xf32, #tpu.memory_space<vmem>>) attributes {dimension_semantics = [#tpu.dimension_semantics<parallel>, #tpu.dimension_semantics<parallel>], iteration_bounds = array<i64: 2, 1>, scalar_prefetch = 0 : i64, scratch_operands = 0 : i64, tpu.core_type = #tpu.core_type<tc>, window_params = [{transform_indices = @transform_0, window_bounds = array<i64: 1, 16, 128>}, {pipeline_mode = #tpu.pipeline_mode<synchronous>, transform_indices = @transform_1, window_bounds = array<i64: 3, 128, 128>}, {pipeline_mode = #tpu.pipeline_mode<synchronous>, transform_indices = @transform_2, window_bounds = array<i64: 1, 128>}, {transform_indices = @transform_3, window_bounds = array<i64: 1, 16, 128>}, {transform_indices = @transform_4, window_bounds = array<i64: 1, 1, 1, 128>}, {transform_indices = @transform_5, window_bounds = array<i64: 1, 1, 1, 128>}]} {
    %c0 = arith.constant 0 : index
    %c0_0 = arith.constant 0 : index
    %c0_1 = arith.constant 0 : index
    %0 = vector.load %arg2[%c0, %c0_0, %c0_1] : memref<1x16x128xf32, #tpu.memory_space<vmem>>, vector<1x16x128xf32>
    %1 = vector.shape_cast %0 : vector<1x16x128xf32> to vector<16x128xf32>
    %cst = arith.constant 0.000000e+00 : f32
    %2 = vector.broadcast %cst : f32 to vector<1x128xf32>
    %3 = tpu.concatenate %2, %1, %2 in 0 : vector<1x128xf32>, vector<16x128xf32>, vector<1x128xf32> -> vector<18x128xf32>
    %4 = vector.extract_strided_slice %3 {offsets = [0, 0], sizes = [16, 128], strides = [1, 1]} : vector<18x128xf32> to vector<16x128xf32>
    %c0_2 = arith.constant 0 : index
    %c0_3 = arith.constant 0 : index
    %c0_4 = arith.constant 0 : index
    %5 = vector.load %arg3[%c0_2, %c0_3, %c0_4] : memref<3x128x128xf32, #tpu.memory_space<vmem>>, vector<1x128x128xf32>
    %6 = vector.shape_cast %5 : vector<1x128x128xf32> to vector<128x128xf32>
    %cst_5 = arith.constant dense<0.000000e+00> : vector<16x128xf32>
    %7 = tpu.matmul %4, %6, %cst_5 {dimension_numbers = #tpu.dot_dimension_numbers<[1], [0], [0], [1], [0, 0, 1, 1], [], []>} : vector<16x128xf32>, vector<128x128xf32>, vector<16x128xf32> -> vector<16x128xf32>
    %8 = vector.extract_strided_slice %3 {offsets = [1, 0], sizes = [16, 128], strides = [1, 1]} : vector<18x128xf32> to vector<16x128xf32>
    %c1 = arith.constant 1 : index
    %c0_6 = arith.constant 0 : index
    %c0_7 = arith.constant 0 : index
    %9 = vector.load %arg3[%c1, %c0_6, %c0_7] : memref<3x128x128xf32, #tpu.memory_space<vmem>>, vector<1x128x128xf32>
    %10 = vector.shape_cast %9 : vector<1x128x128xf32> to vector<128x128xf32>
    %cst_8 = arith.constant dense<0.000000e+00> : vector<16x128xf32>
    %11 = tpu.matmul %8, %10, %cst_8 {dimension_numbers = #tpu.dot_dimension_numbers<[1], [0], [0], [1], [0, 0, 1, 1], [], []>} : vector<16x128xf32>, vector<128x128xf32>, vector<16x128xf32> -> vector<16x128xf32>
    %12 = arith.addf %7, %11 : vector<16x128xf32>
    %13 = vector.extract_strided_slice %3 {offsets = [2, 0], sizes = [16, 128], strides = [1, 1]} : vector<18x128xf32> to vector<16x128xf32>
    %c2 = arith.constant 2 : index
    %c0_9 = arith.constant 0 : index
    %c0_10 = arith.constant 0 : index
    %14 = vector.load %arg3[%c2, %c0_9, %c0_10] : memref<3x128x128xf32, #tpu.memory_space<vmem>>, vector<1x128x128xf32>
    %15 = vector.shape_cast %14 : vector<1x128x128xf32> to vector<128x128xf32>
    %cst_11 = arith.constant dense<0.000000e+00> : vector<16x128xf32>
    %16 = tpu.matmul %13, %15, %cst_11 {dimension_numbers = #tpu.dot_dimension_numbers<[1], [0], [0], [1], [0, 0, 1, 1], [], []>} : vector<16x128xf32>, vector<128x128xf32>, vector<16x128xf32> -> vector<16x128xf32>
    %17 = arith.addf %12, %16 : vector<16x128xf32>
    %c0_12 = arith.constant 0 : index
    %c0_13 = arith.constant 0 : index
    %18 = vector.load %arg4[%c0_12, %c0_13] : memref<1x128xf32, #tpu.memory_space<vmem>>, vector<1x128xf32>
    %19 = vector.broadcast %18 : vector<1x128xf32> to vector<16x128xf32>
    %20 = arith.addf %17, %19 : vector<16x128xf32>
    %c0_14 = arith.constant 0 : index
    %c0_15 = arith.constant 0 : index
    %c0_16 = arith.constant 0 : index
    %21 = vector.load %arg5[%c0_14, %c0_15, %c0_16] : memref<1x16x128xf32, #tpu.memory_space<vmem>>, vector<1x16x128xf32>
    %22 = vector.shape_cast %21 : vector<1x16x128xf32> to vector<16x128xf32>
    %23 = vector.shape_cast %20 : vector<16x128xf32> to vector<1x16x128xf32>
    tpu.vector_store %arg5[%c0_14, %c0_15, %c0_16], %23 {strides = array<i32>} : memref<1x16x128xf32, #tpu.memory_space<vmem>>, vector<1x16x128xf32>,
    %cst_17 = arith.constant dense<0.000000e+00> : vector<128xf32>
    %24 = vector.multi_reduction <add>, %20, %cst_17 [0] : vector<16x128xf32> to vector<128xf32>
    %25 = vector.shape_cast %24 : vector<128xf32> to vector<1x128xf32>
    %c0_18 = arith.constant 0 : index
    %c0_19 = arith.constant 0 : index
    %c0_20 = arith.constant 0 : index
    %c0_21 = arith.constant 0 : index
    %26 = vector.load %arg6[%c0_18, %c0_19, %c0_20, %c0_21] : memref<1x1x1x128xf32, #tpu.memory_space<vmem>>, vector<1x1x1x128xf32>
    %27 = vector.shape_cast %26 : vector<1x1x1x128xf32> to vector<1x128xf32>
    %28 = vector.shape_cast %25 : vector<1x128xf32> to vector<1x1x1x128xf32>
    tpu.vector_store %arg6[%c0_18, %c0_19, %c0_20, %c0_21], %28 {strides = array<i32>} : memref<1x1x1x128xf32, #tpu.memory_space<vmem>>, vector<1x1x1x128xf32>,
    %29 = arith.mulf %20, %20 : vector<16x128xf32>
    %cst_22 = arith.constant dense<0.000000e+00> : vector<128xf32>
    %30 = vector.multi_reduction <add>, %29, %cst_22 [0] : vector<16x128xf32> to vector<128xf32>
    %31 = vector.shape_cast %30 : vector<128xf32> to vector<1x128xf32>
    %c0_23 = arith.constant 0 : index
    %c0_24 = arith.constant 0 : index
    %c0_25 = arith.constant 0 : index
    %c0_26 = arith.constant 0 : index
    %32 = vector.load %arg7[%c0_23, %c0_24, %c0_25, %c0_26] : memref<1x1x1x128xf32, #tpu.memory_space<vmem>>, vector<1x1x1x128xf32>
    %33 = vector.shape_cast %32 : vector<1x1x1x128xf32> to vector<1x128xf32>
    %34 = vector.shape_cast %31 : vector<1x128xf32> to vector<1x1x1x128xf32>
    tpu.vector_store %arg7[%c0_23, %c0_24, %c0_25, %c0_26], %34 {strides = array<i32>} : memref<1x1x1x128xf32, #tpu.memory_space<vmem>>, vector<1x1x1x128xf32>,
    return
  }
  func.func @transform_0(%arg0: i32, %arg1: i32) -> (i32, i32, i32) {
    %c0_i32 = arith.constant 0 : i32
    %c0_i32_0 = arith.constant 0 : i32
    return %arg0, %arg1, %c0_i32 : i32, i32, i32
  }
  func.func @transform_1(%arg0: i32, %arg1: i32) -> (i32, i32, i32) {
    %c0_i32 = arith.constant 0 : i32
    %c0_i32_0 = arith.constant 0 : i32
    %c0_i32_1 = arith.constant 0 : i32
    %c0_i32_2 = arith.constant 0 : i32
    return %c0_i32, %c0_i32_0, %c0_i32_1 : i32, i32, i32
  }
  func.func @transform_2(%arg0: i32, %arg1: i32) -> (i32, i32) {
    %c0_i32 = arith.constant 0 : i32
    %c0_i32_0 = arith.constant 0 : i32
    %c0_i32_1 = arith.constant 0 : i32
    return %c0_i32, %c0_i32_0 : i32, i32
  }
  func.func @transform_3(%arg0: i32, %arg1: i32) -> (i32, i32, i32) {
    %c0_i32 = arith.constant 0 : i32
    %c0_i32_0 = arith.constant 0 : i32
    return %arg0, %arg1, %c0_i32 : i32, i32, i32
  }
  func.func @transform_4(%arg0: i32, %arg1: i32) -> (i32, i32, i32, i32) {
    %c0_i32 = arith.constant 0 : i32
    %c0_i32_0 = arith.constant 0 : i32
    %c0_i32_1 = arith.constant 0 : i32
    return %arg0, %arg1, %c0_i32, %c0_i32_0 : i32, i32, i32, i32
  }
  func.func @transform_5(%arg0: i32, %arg1: i32) -> (i32, i32, i32, i32) {
    %c0_i32 = arith.constant 0 : i32
    %c0_i32_0 = arith.constant 0 : i32
    %c0_i32_1 = arith.constant 0 : i32
    return %arg0, %arg1, %c0_i32, %c0_i32_0 : i32, i32, i32, i32
  }
}

</mosaic_0001>

<llo_original>
// kernel: tpu_custom_call.1
$region0: #{tpu_custom_call.1}
  #allocation0 [shape = 'u32[]', space=smem, size = 0x4, offset = 0x4, fixed_abs, tag = 'smem constant byte address 0x4 - core index']
  #allocation1 [shape = 'u32[72,128]{1,0:T(1,128)}', space=vmem, size = 0x9000, scoped, tag = 'internal scratch']
  %s0 = inlined_call_operand.hbm [shape: f32[2,16,128], index: 0, kind: input, shape index: {}]
  %s1 = inlined_call_operand.hbm [shape: f32[3,128,128], index: 1, kind: input, shape index: {}]
  %s2 = inlined_call_operand.vmem [shape: f32[1,128], index: 2, kind: input, shape index: {}]
  %s3 = inlined_call_operand.hbm [shape: f32[2,16,128], index: 3, kind: output, shape index: {0}]
  %s4 = inlined_call_operand.hbm [shape: f32[2,1,1,128], index: 4, kind: output, shape index: {1}]
  %s5 = inlined_call_operand.hbm [shape: f32[2,1,1,128], index: 5, kind: output, shape index: {2}]
  %6 = xla_tuple %s3, %s4, %s5
  %s7 = sld [smem:[#allocation0]]
  $region69: #{tpu_custom_call.1} parent=0
    _
  %s9 = ssub.s32 1, %s7
  %s10 = scalar_select 0, %s9, %s7
  $region1: #{tpu_custom_call.1} parent=0
    #allocation2 [shape = 'u8[16384]{0}', space=vmem, size = 0x4000, scoped, tag = 'input window, operand 0']
    #allocation3 [shape = 's32[2]{0}', space=sflag, size = 0x8, scoped, tag = 'scoped memory for tpu_custom_call.1']
    #allocation4 [shape = 's32[2]{0}', space=sflag, size = 0x8, scoped, tag = 'scoped memory for tpu_custom_call.1']
    #allocation5 [shape = 'u8[196608]{0}', space=vmem, size = 0x30000, scoped, tag = 'input window, operand 1, single buffered']
    #allocation6 [shape = 's32[1]{0}', space=sflag, size = 0x4, scoped, tag = 'scoped memory for tpu_custom_call.1']
    #allocation7 [shape = 'u8[16384]{0}', space=vmem, size = 0x4000, scoped, tag = 'output window, operand 0']
    #allocation8 [shape = 'u8[1024]{0}', space=vmem, size = 0x400, scoped, tag = 'output window, operand 1']
    #allocation9 [shape = 's32[2]{0}', space=sflag, size = 0x8, scoped, tag = 'scoped memory for tpu_custom_call.1']
    #allocation10 [shape = 'u8[1024]{0}', space=vmem, size = 0x400, scoped, tag = 'output window, operand 2']
    %11 = vsyncpa [#allocation3], 0
    %s12 = scalar_lea.sflag [#allocation3], 1
    %13 = vsyncpa %s12, 0
    %14 = vsyncpa [#allocation6], 0
    %15 = vsyncpa [#allocation4], 0
    %s16 = scalar_lea.sflag [#allocation4], 1
    %17 = vsyncpa %s16, 0
    %18 = vsyncpa [#allocation9], 0
    %s19 = scalar_lea.sflag [#allocation9], 1
    %20 = vsyncpa %s19, 0
    loop: start=0, step=1, limit=4
    $region2: #{tpu_custom_call.1} parent=1 // loop_pre_header
      _
    $region3: #{tpu_custom_call.1} parent=1 // loop_header
      %s22 = sphi 0, %s26
      %p23 = scmp.ge.s32.totalorder %s22, 4
      %s29 = sphi 0, %s41
      %s30 = sphi 0, %s37
      %s31 = sphi 0, %s29
      %s32 = sphi 0, %s30
      %s33 = sphi 0, %s31
      %s34 = sphi 0, %s32
      %s46 = sphi 0, %s48
      %s49 = sphi 0, %s46
      %s50 = sphi 0, %s49
      %s66 = sphi 0, %s50
      %s70 = sphi 0, %s70
      %s72 = sphi 0, %s70
      %s73 = sphi 0, %s72
      %s87 = sphi 0, %s73
      %s91 = sphi 0, %s91
      %s93 = sphi 0, %s91
      %s94 = sphi 0, %s93
      %s108 = sphi 0, %s94
      %s116 = sphi 0, %s118
      %s119 = sphi 0, %s116
      %s120 = sphi 0, %s119
      %s136 = sphi 0, %s120
      %s144 = sphi 0, %s146
      %s147 = sphi 0, %s144
      %s148 = sphi 0, %s147
      %s164 = sphi 0, %s148
      %s172 = sphi 0, %s174
      %s175 = sphi 0, %s172
      %s176 = sphi 0, %s175
      %s192 = sphi 0, %s176
    $region4: #{tpu_custom_call.1} parent=1 // loop_header_branch
      %25 = sbr.rel (%p23) target = $region8
    $region5: #{tpu_custom_call.1} parent=1 // loop_body
      %s27 = ssub.s32 %s22, 1
      %s28 = ssub.s32 %s22, 2
      %s35 = sadd.s32 1, %s30
      %p36 = scmp.ge.s32.totalorder %s35, 1
      %s37 = scalar_select %p36, 0, %s35
      %s38 = sadd.s32 1, %s29
      %s39 = scalar_select %p36, %s38, %s29
      %p40 = scmp.ge.s32.totalorder %s39, 2
      %s41 = scalar_select %p40, 0, %s39
      %s42 = ssub.s32 %s29, %s41
      %s43 = ssub.s32 %s30, %s37
      %s44 = sor.u32 %s42, %s43
      %p45 = scmp.eq.s32.totalorder %s44, 0
      %s47 = sadd.s32 %s46, 1
      %s48 = scalar_select %p45, %s46, %s47
      %p51 = pneg %p45
      %p52 = scmp.eq.s32.totalorder %s22, 1
      %p53 = por %p51, %p52
      %p54 = scmp.ne.s32.totalorder %s46, %s49
      %p55 = scmp.eq.s32.totalorder %s22, 0
      %p56 = por %p54, %p55
      %p57 = scmp.ne.s32.totalorder %s46, %s49
      %p58 = scmp.eq.s32.totalorder %s27, 1
      %p59 = por %p57, %p58
      %p60 = scmp.ne.s32.totalorder %s49, %s50
      %p61 = scmp.eq.s32.totalorder %s27, 0
      %p62 = por %p60, %p61
      %p63 = scmp.ne.s32.totalorder %s49, %s50
      %p64 = scmp.eq.s32.totalorder %s28, 1
      %p65 = por %p63, %p64
      %p67 = scmp.ne.s32.totalorder %s50, %s66
      %p68 = scmp.eq.s32.totalorder %s28, 0
      %p69 = por %p67, %p68
      %s71 = sadd.s32 %s70, 1
      %p74 = scmp.eq.s32.totalorder %s22, 1
      %p75 = scmp.ne.s32.totalorder %s70, %s72
      %p76 = scmp.eq.s32.totalorder %s22, 0
      %p77 = por %p75, %p76
      %p78 = scmp.ne.s32.totalorder %s70, %s72
      %p79 = scmp.eq.s32.totalorder %s27, 1
      %p80 = por %p78, %p79
      %p81 = scmp.ne.s32.totalorder %s72, %s73
      %p82 = scmp.eq.s32.totalorder %s27, 0
      %p83 = por %p81, %p82
      %p84 = scmp.ne.s32.totalorder %s72, %s73
      %p85 = scmp.eq.s32.totalorder %s28, 1
      %p86 = por %p84, %p85
      %p88 = scmp.ne.s32.totalorder %s73, %s87
      %p89 = scmp.eq.s32.totalorder %s28, 0
      %p90 = por %p88, %p89
      %s92 = sadd.s32 %s91, 1
      %p95 = scmp.eq.s32.totalorder %s22, 1
      %p96 = scmp.ne.s32.totalorder %s91, %s93
      %p97 = scmp.eq.s32.totalorder %s22, 0
      %p98 = por %p96, %p97
      %p99 = scmp.ne.s32.totalorder %s91, %s93
      %p100 = scmp.eq.s32.totalorder %s27, 1
      %p101 = por %p99, %p100
      %p102 = scmp.ne.s32.totalorder %s93, %s94
      %p103 = scmp.eq.s32.totalorder %s27, 0
      %p104 = por %p102, %p103
      %p105 = scmp.ne.s32.totalorder %s93, %s94
      %p106 = scmp.eq.s32.totalorder %s28, 1
      %p107 = por %p105, %p106
      %p109 = scmp.ne.s32.totalorder %s94, %s108
      %p110 = scmp.eq.s32.totalorder %s28, 0
      %p111 = por %p109, %p110
      %s112 = ssub.s32 %s29, %s41
      %s113 = ssub.s32 %s30, %s37
      %s114 = sor.u32 %s112, %s113
      %p115 = scmp.eq.s32.totalorder %s114, 0
      %s117 = sadd.s32 %s116, 1
      %s118 = scalar_select %p115, %s116, %s117
      %p121 = pneg %p115
      %p122 = scmp.eq.s32.totalorder %s22, 1
      %p123 = por %p121, %p122
      %p124 = scmp.ne.s32.totalorder %s116, %s119
      %p125 = scmp.eq.s32.totalorder %s22, 0
      %p126 = por %p124, %p125
      %p127 = scmp.ne.s32.totalorder %s116, %s119
      %p128 = scmp.eq.s32.totalorder %s27, 1
      %p129 = por %p127, %p128
      %p130 = scmp.ne.s32.totalorder %s119, %s120
      %p131 = scmp.eq.s32.totalorder %s27, 0
      %p132 = por %p130, %p131
      %p133 = scmp.ne.s32.totalorder %s119, %s120
      %p134 = scmp.eq.s32.totalorder %s28, 1
      %p135 = por %p133, %p134
      %p137 = scmp.ne.s32.totalorder %s120, %s136
      %p138 = scmp.eq.s32.totalorder %s28, 0
      %p139 = por %p137, %p138
      %s140 = ssub.s32 %s29, %s41
      %s141 = ssub.s32 %s30, %s37
      %s142 = sor.u32 %s140, %s141
      %p143 = scmp.eq.s32.totalorder %s142, 0
      %s145 = sadd.s32 %s144, 1
      %s146 = scalar_select %p143, %s144, %s145
      %p149 = pneg %p143
      %p150 = scmp.eq.s32.totalorder %s22, 1
      %p151 = por %p149, %p150
      %p152 = scmp.ne.s32.totalorder %s144, %s147
      %p153 = scmp.eq.s32.totalorder %s22, 0
      %p154 = por %p152, %p153
      %p155 = scmp.ne.s32.totalorder %s144, %s147
      %p156 = scmp.eq.s32.totalorder %s27, 1
      %p157 = por %p155, %p156
      %p158 = scmp.ne.s32.totalorder %s147, %s148
      %p159 = scmp.eq.s32.totalorder %s27, 0
      %p160 = por %p158, %p159
      %p161 = scmp.ne.s32.totalorder %s147, %s148
      %p162 = scmp.eq.s32.totalorder %s28, 1
      %p163 = por %p161, %p162
      %p165 = scmp.ne.s32.totalorder %s148, %s164
      %p166 = scmp.eq.s32.totalorder %s28, 0
      %p167 = por %p165, %p166
      %s168 = ssub.s32 %s29, %s41
      %s169 = ssub.s32 %s30, %s37
      %s170 = sor.u32 %s168, %s169
      %p171 = scmp.eq.s32.totalorder %s170, 0
      %s173 = sadd.s32 %s172, 1
      %s174 = scalar_select %p171, %s172, %s173
      %p177 = pneg %p171
      %p178 = scmp.eq.s32.totalorder %s22, 1
      %p179 = por %p177, %p178
      %p180 = scmp.ne.s32.totalorder %s172, %s175
      %p181 = scmp.eq.s32.totalorder %s22, 0
      %p182 = por %p180, %p181
      %p183 = scmp.ne.s32.totalorder %s172, %s175
      %p184 = scmp.eq.s32.totalorder %s27, 1
      %p185 = por %p183, %p184
      %p186 = scmp.ne.s32.totalorder %s175, %s176
      %p187 = scmp.eq.s32.totalorder %s27, 0
      %p188 = por %p186, %p187
      %p189 = scmp.ne.s32.totalorder %s175, %s176
      %p190 = scmp.eq.s32.totalorder %s28, 1
      %p191 = por %p189, %p190
      %p193 = scmp.ne.s32.totalorder %s176, %s192
      %p194 = scmp.eq.s32.totalorder %s28, 0
      %p195 = por %p193, %p194
      %p196 = scmp.le.s32.totalorder 1, %s22
      %p197 = scmp.lt.s32.totalorder %s22, 3
      %p198 = pnand %p196, %p197
      %p199 = pneg %p198
      // Predicated region
      $region9: #{tpu_custom_call.1} parent=5 // pred_check
        _
      $region10: #{tpu_custom_call.1} parent=5 // pred_check_branch
        %201 = sbr.rel (%p198) target = $region12
      $region11: #{tpu_custom_call.1} parent=5 // pred_region
        %s202 = ssub.s32 %s22, 1
        // Predicated region
        $region13: #{tpu_custom_call.1} parent=11 // pred_check
          %p203 = pneg %p83
        $region14: #{tpu_custom_call.1} parent=11 // pred_check_branch
          %205 = sbr.rel (%p203) target = $region16
        $region15: #{tpu_custom_call.1} parent=11 // pred_region
          %207 = vsyncadd [#allocation6], 0
          %s208 = sshll.u32 %s1, 4
          %s209 = int_to_ptr.hbm [resolvable:$true] %s208
          %s210 = sshll.u32 [#allocation5], 4
          %s211 = int_to_ptr.vmem [resolvable:$true] %s210
          %216 = dma.hbm_to_vmem [thread:$0]  %s209, 6144, %s211, [#allocation6], 128, 128, 8
        $region16: #{tpu_custom_call.1} parent=11 // pred_fallthru
          _
        // Predicated region
        $region17: #{tpu_custom_call.1} parent=11 // pred_check
          %p217 = pneg %p104
        $region18: #{tpu_custom_call.1} parent=11 // pred_check_branch
          %219 = sbr.rel (%p217) target = $region20
        $region19: #{tpu_custom_call.1} parent=11 // pred_region
          _
        $region20: #{tpu_custom_call.1} parent=11 // pred_fallthru
          _
      $region12: #{tpu_custom_call.1} parent=5 // pred_fallthru
        _
      %p220 = scmp.lt.s32.totalorder %s22, 2
      // Predicated region
      $region21: #{tpu_custom_call.1} parent=5 // pred_check
        %p221 = pneg %p220
      $region22: #{tpu_custom_call.1} parent=5 // pred_check_branch
        %223 = sbr.rel (%p221) target = $region24
      $region23: #{tpu_custom_call.1} parent=5 // pred_region
        // Predicated region
        $region25: #{tpu_custom_call.1} parent=23 // pred_check
          %p224 = pneg %p56
        $region26: #{tpu_custom_call.1} parent=23 // pred_check_branch
          %226 = sbr.rel (%p224) target = $region28
        $region27: #{tpu_custom_call.1} parent=23 // pred_region
          %s227 = sand.u32 %s46, 1
          %s228 = scalar_lea.sflag [#allocation3], %s227
          %s229 = sand.u32 %s46, 1
          %s230 = smul.addr %s229, 16
          %s231 = scalar_lea.vmem [#allocation2], %s230
          %s232 = smul.u32 2, %s30
          %234 = vsyncadd %s228, 0
          %s235 = smul.addr %s29, 2
          %s236 = sadd.s32 %s232, %s235
          %s237 = smul.addr %s236, 8
          %s238 = scalar_lea.hbm %s0, %s237
          %s239 = sshll.u32 %s238, 4
          %s240 = int_to_ptr.hbm [resolvable:$true] %s239
          %s241 = sshll.u32 %s231, 4
          %s242 = int_to_ptr.vmem [resolvable:$true] %s241
          %247 = dma.hbm_to_vmem [thread:$0]  %s240, 256, %s242, %s228, 128, 128, 8
        $region28: #{tpu_custom_call.1} parent=23 // pred_fallthru
          _
      $region24: #{tpu_custom_call.1} parent=5 // pred_fallthru
        _
      %p248 = scmp.le.s32.totalorder 1, %s22
      %p249 = scmp.lt.s32.totalorder %s22, 3
      %p250 = pnand %p248, %p249
      %p251 = pneg %p250
      // Predicated region
      $region29: #{tpu_custom_call.1} parent=5 // pred_check
        _
      $region30: #{tpu_custom_call.1} parent=5 // pred_check_branch
        %253 = sbr.rel (%p250) target = $region32
      $region31: #{tpu_custom_call.1} parent=5 // pred_region
        %s254 = ssub.s32 %s22, 1
        %s255 = sand.u32 %s49, 1
        %s256 = scalar_lea.sflag [#allocation3], %s255
        %s257 = sand.u32 %s49, 1
        %s258 = smul.addr %s257, 16
        %s259 = scalar_lea.vmem [#allocation2], %s258
        // Predicated region
        $region33: #{tpu_custom_call.1} parent=31 // pred_check
          %p260 = pneg %p62
        $region34: #{tpu_custom_call.1} parent=31 // pred_check_branch
          %262 = sbr.rel (%p260) target = $region36
        $region35: #{tpu_custom_call.1} parent=31 // pred_region
          %264 = dma.done %s256, 256
        $region36: #{tpu_custom_call.1} parent=31 // pred_fallthru
          _
        // Predicated region
        $region37: #{tpu_custom_call.1} parent=31 // pred_check
          %p265 = pneg %p83
        $region38: #{tpu_custom_call.1} parent=31 // pred_check_branch
          %267 = sbr.rel (%p265) target = $region40
        $region39: #{tpu_custom_call.1} parent=31 // pred_region
          %269 = dma.done [#allocation6], 6144
        $region40: #{tpu_custom_call.1} parent=31 // pred_fallthru
          _
        %s270 = sand.u32 %s49, 1
        %s271 = scalar_lea.sflag [#allocation3], %s270
        %s272 = sand.u32 %s49, 1
        %s273 = smul.addr %s272, 16
        %s274 = scalar_lea.vmem [#allocation2], %s273
        %p275 = pneg %p62
        %p276 = pneg %p59
        %p277 = pneg %p83
        %p278 = pneg %p80
        %p279 = pneg %p104
        %p280 = pneg %p101
        %p281 = pneg %p132
        %p282 = pneg %p129
        %s283 = sand.u32 %s119, 1
        %s284 = scalar_lea.sflag [#allocation4], %s283
        %s285 = sand.u32 %s119, 1
        %s286 = smul.addr %s285, 16
        %s287 = scalar_lea.vmem [#allocation7], %s286
        %p288 = pneg %p160
        %p289 = pneg %p157
        %s290 = sand.u32 %s27, 1
        %s291 = scalar_lea.sflag [#allocation9], %s290
        %s292 = sand.u32 %s147, 1
        %s293 = scalar_lea.vmem [#allocation8], %s292
        %p294 = pneg %p188
        %p295 = pneg %p185
        %s296 = sand.u32 %s27, 1
        %s297 = scalar_lea.sflag [#allocation9], %s296
        %s298 = sand.u32 %s175, 1
        %s299 = scalar_lea.vmem [#allocation10], %s298
        %s300 = smul.u32 2, %s32
        %s301 = smul.u32 2, %s32
        %v302 = vld [vmem:[%s259] sm:$0xff]
        %v303 = vld [vmem:[%s259 + $0x8] sm:$0xff]
        %vm306 = vcmask 1040384
        %v307 = vrot.slane %v302, 7
        %v308 = vrot.slane %v303, 7
        %v309 = vsel %vm306, %v307, %v308
        %v313 = vsel %vm306, 0.0, %v307
        %v314 = vsel %vm306, %v308, 0.0
        %v315 = vld [vmem:[#allocation5] sm:$0xff]
        %v316 = vld [vmem:[#allocation5 + $0x8] sm:$0xff]
        %v317 = vld [vmem:[#allocation5 + $0x10] sm:$0xff]
        %v318 = vld [vmem:[#allocation5 + $0x18] sm:$0xff]
        %v319 = vld [vmem:[#allocation5 + $0x20] sm:$0xff]
        %v320 = vld [vmem:[#allocation5 + $0x28] sm:$0xff]
        %v321 = vld [vmem:[#allocation5 + $0x30] sm:$0xff]
        %v322 = vld [vmem:[#allocation5 + $0x38] sm:$0xff]
        %v323 = vld [vmem:[#allocation5 + $0x40] sm:$0xff]
        %v324 = vld [vmem:[#allocation5 + $0x48] sm:$0xff]
        %v325 = vld [vmem:[#allocation5 + $0x50] sm:$0xff]
        %v326 = vld [vmem:[#allocation5 + $0x58] sm:$0xff]
        %v327 = vld [vmem:[#allocation5 + $0x60] sm:$0xff]
        %v328 = vld [vmem:[#allocation5 + $0x68] sm:$0xff]
        %v329 = vld [vmem:[#allocation5 + $0x70] sm:$0xff]
        %v330 = vld [vmem:[#allocation5 + $0x78] sm:$0xff]
        %s331 = scalar_lea.vmem [#allocation5], 128
        %v332 = vld [vmem:[%s331] sm:$0xff]
        %v333 = vld [vmem:[%s331 + $0x8] sm:$0xff]
        %v334 = vld [vmem:[%s331 + $0x10] sm:$0xff]
        %v335 = vld [vmem:[%s331 + $0x18] sm:$0xff]
        %v336 = vld [vmem:[%s331 + $0x20] sm:$0xff]
        %v337 = vld [vmem:[%s331 + $0x28] sm:$0xff]
        %v338 = vld [vmem:[%s331 + $0x30] sm:$0xff]
        %v339 = vld [vmem:[%s331 + $0x38] sm:$0xff]
        %v340 = vld [vmem:[%s331 + $0x40] sm:$0xff]
        %v341 = vld [vmem:[%s331 + $0x48] sm:$0xff]
        %v342 = vld [vmem:[%s331 + $0x50] sm:$0xff]
        %v343 = vld [vmem:[%s331 + $0x58] sm:$0xff]
        %v344 = vld [vmem:[%s331 + $0x60] sm:$0xff]
        %v345 = vld [vmem:[%s331 + $0x68] sm:$0xff]
        %v346 = vld [vmem:[%s331 + $0x70] sm:$0xff]
        %v347 = vld [vmem:[%s331 + $0x78] sm:$0xff]
        %vm350 = vcmask 1046528
        %v351 = vrot.slane %v313, 1
        %v352 = vrot.slane %v309, 1
        %v353 = vsel %vm350, %v351, %v352
        %v354 = vrot.slane %v314, 1
        %v355 = vsel %vm350, %v352, %v354
        %358 = vmatpush.msra.mxu0 %v347
        %359 = vmatpush.msra.mxu0 %v346
        %360 = vmatpush.msra.mxu0 %v345
        %361 = vmatpush.msra.mxu0 %v344
        %362 = vmatpush.msra.mxu0 %v343
        %363 = vmatpush.msra.mxu0 %v342
        %364 = vmatpush.msra.mxu0 %v341
        %365 = vmatpush.msra.mxu0 %v340
        %366 = vmatpush.msra.mxu0 %v339
        %367 = vmatpush.msra.mxu0 %v338
        %368 = vmatpush.msra.mxu0 %v337
        %369 = vmatpush.msra.mxu0 %v336
        %370 = vmatpush.msra.mxu0 %v335
        %371 = vmatpush.msra.mxu0 %v334
        %372 = vmatpush.msra.mxu0 %v333
        %373 = vmatpush.msra.mxu0 %v332
        %374 = vmatmul.f32.gmra.mxu0 %v353
        %v375 = vpop.f32.mrf.mxu0
        %v376 = vadd.f32 0.0, %v375
        %377 = vmatmul.f32.gmra.mxu0 %v355
        %v378 = vpop.f32.mrf.mxu0
        %v379 = vadd.f32 0.0, %v378
        %380 = vdwg.mxu0
        %381 = vmatpush.msra.mxu0 %v330
        %382 = vmatpush.msra.mxu0 %v329
        %383 = vmatpush.msra.mxu0 %v328
        %384 = vmatpush.msra.mxu0 %v327
        %385 = vmatpush.msra.mxu0 %v326
        %386 = vmatpush.msra.mxu0 %v325
        %387 = vmatpush.msra.mxu0 %v324
        %388 = vmatpush.msra.mxu0 %v323
        %389 = vmatpush.msra.mxu0 %v322
        %390 = vmatpush.msra.mxu0 %v321
        %391 = vmatpush.msra.mxu0 %v320
        %392 = vmatpush.msra.mxu0 %v319
        %393 = vmatpush.msra.mxu0 %v318
        %394 = vmatpush.msra.mxu0 %v317
        %395 = vmatpush.msra.mxu0 %v316
        %396 = vmatpush.msra.mxu0 %v315
        %397 = vmatmul.f32.gmra.mxu0 %v313
        %v398 = vpop.f32.mrf.mxu0
        %v399 = vadd.f32 %v376, %v398
        %400 = vmatmul.f32.gmra.mxu0 %v309
        %v401 = vpop.f32.mrf.mxu0
        %v402 = vadd.f32 %v379, %v401
        %403 = vdwg.mxu0
        %s404 = scalar_lea.vmem [#allocation5], 256
        %v405 = vld [vmem:[%s404] sm:$0xff]
        %v406 = vld [vmem:[%s404 + $0x8] sm:$0xff]
        %v407 = vld [vmem:[%s404 + $0x10] sm:$0xff]
        %v408 = vld [vmem:[%s404 + $0x18] sm:$0xff]
        %v409 = vld [vmem:[%s404 + $0x20] sm:$0xff]
        %v410 = vld [vmem:[%s404 + $0x28] sm:$0xff]
        %v411 = vld [vmem:[%s404 + $0x30] sm:$0xff]
        %v412 = vld [vmem:[%s404 + $0x38] sm:$0xff]
        %v413 = vld [vmem:[%s404 + $0x40] sm:$0xff]
        %v414 = vld [vmem:[%s404 + $0x48] sm:$0xff]
        %v415 = vld [vmem:[%s404 + $0x50] sm:$0xff]
        %v416 = vld [vmem:[%s404 + $0x58] sm:$0xff]
        %v417 = vld [vmem:[%s404 + $0x60] sm:$0xff]
        %v418 = vld [vmem:[%s404 + $0x68] sm:$0xff]
        %v419 = vld [vmem:[%s404 + $0x70] sm:$0xff]
        %v420 = vld [vmem:[%s404 + $0x78] sm:$0xff]
        %vm421 = vcmask 1045504
        %v422 = vrot.slane %v313, 2
        %v423 = vrot.slane %v309, 2
        %v424 = vsel %vm421, %v422, %v423
        %v425 = vrot.slane %v314, 2
        %v426 = vsel %vm421, %v423, %v425
        %429 = vmatpush.msra.mxu0 %v420
        %430 = vmatpush.msra.mxu0 %v419
        %431 = vmatpush.msra.mxu0 %v418
        %432 = vmatpush.msra.mxu0 %v417
        %433 = vmatpush.msra.mxu0 %v416
        %434 = vmatpush.msra.mxu0 %v415
        %435 = vmatpush.msra.mxu0 %v414
        %436 = vmatpush.msra.mxu0 %v413
        %437 = vmatpush.msra.mxu0 %v412
        %438 = vmatpush.msra.mxu0 %v411
        %439 = vmatpush.msra.mxu0 %v410
        %440 = vmatpush.msra.mxu0 %v409
        %441 = vmatpush.msra.mxu0 %v408
        %442 = vmatpush.msra.mxu0 %v407
        %443 = vmatpush.msra.mxu0 %v406
        %444 = vmatpush.msra.mxu0 %v405
        %445 = vmatmul.f32.gmra.mxu0 %v424
        %v446 = vpop.f32.mrf.mxu0
        %v447 = vadd.f32 0.0, %v446
        %448 = vmatmul.f32.gmra.mxu0 %v426
        %v449 = vpop.f32.mrf.mxu0
        %v450 = vadd.f32 0.0, %v449
        %451 = vdwg.mxu0
        %v452 = vadd.f32 %v399, %v447
        %v453 = vadd.f32 %v402, %v450
        %v454 = vld [vmem:[%s2] sm:$0x1]
        %v456 = vperm.slane %v454, 0
        %v458 = vadd.f32 %v452, %v456
        %v459 = vadd.f32 %v453, %v456
        %460 = vst [vmem:[%s287] sm:$0xff] %v458
        %461 = vst [vmem:[%s287 + $0x8] sm:$0xff] %v459
        %v462 = vadd.f32 %v458, %v459
        %v463 = vrot.slane %v462, 4
        %v464 = vadd.f32 %v462, %v463
        %v465 = vrot.slane %v464, 2
        %v466 = vadd.f32 %v464, %v465
        %v467 = vrot.slane %v466, 1
        %v468 = vadd.f32 %v466, %v467
        %469 = vst [vmem:[%s293] sm:$0x1] %v468
        %v470 = vmul.f32 %v458, %v458
        %v471 = vmul.f32 %v459, %v459
        %v472 = vadd.f32 %v470, %v471
        %v473 = vrot.slane %v472, 4
        %v474 = vadd.f32 %v472, %v473
        %v475 = vrot.slane %v474, 2
        %v476 = vadd.f32 %v474, %v475
        %v477 = vrot.slane %v476, 1
        %v478 = vadd.f32 %v476, %v477
        %479 = vst [vmem:[%s299] sm:$0x1] %v478
        %s480 = sand.u32 %s119, 1
        %s481 = scalar_lea.sflag [#allocation4], %s480
        %s482 = sand.u32 %s119, 1
        %s483 = smul.addr %s482, 16
        %s484 = scalar_lea.vmem [#allocation7], %s483
        %s485 = sand.u32 %s27, 1
        %s486 = scalar_lea.sflag [#allocation9], %s485
        %s487 = sand.u32 %s147, 1
        %s488 = scalar_lea.vmem [#allocation8], %s487
        %s489 = sand.u32 %s27, 1
        %s490 = scalar_lea.sflag [#allocation9], %s489
        %s491 = sand.u32 %s175, 1
        %s492 = scalar_lea.vmem [#allocation10], %s491
        // Predicated region
        $region41: #{tpu_custom_call.1} parent=31 // pred_check
          %p493 = pneg %p129
        $region42: #{tpu_custom_call.1} parent=31 // pred_check_branch
          %495 = sbr.rel (%p493) target = $region44
        $region43: #{tpu_custom_call.1} parent=31 // pred_region
          %s496 = smul.u32 2, %s32
          %498 = vsyncadd %s481, 0
          %s499 = smul.addr %s31, 2
          %s500 = sadd.s32 %s496, %s499
          %s501 = smul.addr %s500, 8
          %s502 = scalar_lea.hbm %s3, %s501
          %s503 = sshll.u32 %s484, 4
          %s504 = int_to_ptr.vmem [resolvable:$true] %s503
          %s505 = sshll.u32 %s502, 4
          %s506 = int_to_ptr.hbm [resolvable:$true] %s505
          %511 = dma.vmem_to_hbm [thread:$0]  %s504, 256, %s506, %s481, 128, 128, 8
        $region44: #{tpu_custom_call.1} parent=31 // pred_fallthru
          _
        // Predicated region
        $region45: #{tpu_custom_call.1} parent=31 // pred_check
          %p512 = pneg %p157
        $region46: #{tpu_custom_call.1} parent=31 // pred_check_branch
          %514 = sbr.rel (%p512) target = $region48
        $region47: #{tpu_custom_call.1} parent=31 // pred_region
          %516 = vsyncadd %s486, 0
          %s517 = sadd.s32 %s32, %s31
          %s518 = scalar_lea.hbm %s4, %s517
          %s520 = sshll.u32 %s488, 4
          %s521 = int_to_ptr.vmem [resolvable:$true] %s520
          %s522 = sshll.u32 %s518, 4
          %s523 = int_to_ptr.hbm [resolvable:$true] %s522
          %525 = dma.vmem_to_hbm [thread:$0]  %s521, 16, %s523, %s486
        $region48: #{tpu_custom_call.1} parent=31 // pred_fallthru
          _
        // Predicated region
        $region49: #{tpu_custom_call.1} parent=31 // pred_check
          %p526 = pneg %p185
        $region50: #{tpu_custom_call.1} parent=31 // pred_check_branch
          %528 = sbr.rel (%p526) target = $region52
        $region51: #{tpu_custom_call.1} parent=31 // pred_region
          %530 = vsyncadd %s490, 0
          %s531 = sadd.s32 %s32, %s31
          %s532 = scalar_lea.hbm %s5, %s531
          %s534 = sshll.u32 %s492, 4
          %s535 = int_to_ptr.vmem [resolvable:$true] %s534
          %s536 = sshll.u32 %s532, 4
          %s537 = int_to_ptr.hbm [resolvable:$true] %s536
          %539 = dma.vmem_to_hbm [thread:$0]  %s535, 16, %s537, %s490
        $region52: #{tpu_custom_call.1} parent=31 // pred_fallthru
          _
      $region32: #{tpu_custom_call.1} parent=5 // pred_fallthru
        _
      %p540 = scmp.le.s32.totalorder 2, %s22
      // Predicated region
      $region53: #{tpu_custom_call.1} parent=5 // pred_check
        %p541 = pneg %p540
      $region54: #{tpu_custom_call.1} parent=5 // pred_check_branch
        %543 = sbr.rel (%p541) target = $region56
      $region55: #{tpu_custom_call.1} parent=5 // pred_region
        %s544 = ssub.s32 %s22, 2
        // Predicated region
        $region57: #{tpu_custom_call.1} parent=55 // pred_check
          %p545 = pneg %p135
        $region58: #{tpu_custom_call.1} parent=55 // pred_check_branch
          %547 = sbr.rel (%p545) target = $region60
        $region59: #{tpu_custom_call.1} parent=55 // pred_region
          %s548 = sand.u32 %s120, 1
          %s549 = scalar_lea.sflag [#allocation4], %s548
          %s550 = sand.u32 %s120, 1
          %s551 = smul.addr %s550, 16
          %s552 = scalar_lea.vmem [#allocation7], %s551
          %554 = dma.done %s549, 256
        $region60: #{tpu_custom_call.1} parent=55 // pred_fallthru
          _
        // Predicated region
        $region61: #{tpu_custom_call.1} parent=55 // pred_check
          %p555 = pneg %p163
        $region62: #{tpu_custom_call.1} parent=55 // pred_check_branch
          %557 = sbr.rel (%p555) target = $region64
        $region63: #{tpu_custom_call.1} parent=55 // pred_region
          %s558 = sand.u32 %s28, 1
          %s559 = scalar_lea.sflag [#allocation9], %s558
          %s560 = sand.u32 %s148, 1
          %s561 = scalar_lea.vmem [#allocation8], %s560
          %563 = dma.done %s559, 16
        $region64: #{tpu_custom_call.1} parent=55 // pred_fallthru
          _
        // Predicated region
        $region65: #{tpu_custom_call.1} parent=55 // pred_check
          %p564 = pneg %p191
        $region66: #{tpu_custom_call.1} parent=55 // pred_check_branch
          %566 = sbr.rel (%p564) target = $region68
        $region67: #{tpu_custom_call.1} parent=55 // pred_region
          %s567 = sand.u32 %s28, 1
          %s568 = scalar_lea.sflag [#allocation9], %s567
          %s569 = sand.u32 %s176, 1
          %s570 = scalar_lea.vmem [#allocation10], %s569
          %572 = dma.done %s568, 16
        $region68: #{tpu_custom_call.1} parent=55 // pred_fallthru
          _
      $region56: #{tpu_custom_call.1} parent=5 // pred_fallthru
        _
    $region6: #{tpu_custom_call.1} parent=1 // loop_footer
      %s26 = sadd.s32 1, %s22
    $region7: #{tpu_custom_call.1} parent=1 // loop_footer_branch
      %21 = sbr.rel target = $region3
    $region8: #{tpu_custom_call.1} parent=1 // loop_exit
      _
    %573 = vsyncpa [#allocation3], 1
    %s574 = scalar_lea.sflag [#allocation3], 1
    %575 = vsyncpa %s574, 1
    %576 = vsyncpa [#allocation6], 1
    %577 = vsyncpa [#allocation4], 1
    %s578 = scalar_lea.sflag [#allocation4], 1
    %579 = vsyncpa %s578, 1
    %580 = vsyncpa [#allocation9], 1
    %s581 = scalar_lea.sflag [#allocation9], 1
    %582 = vsyncpa %s581, 1

</llo_original>
